<compile_context>
chip_gen: v7x
topology: tpu7x:2x2x1
jax: 0.10.0
libtpu: 0.0.40
codegen_flags: <defaults>
</compile_context>

<pallas_src>
import functools

import jax
import jax.numpy as jnp
from jax.experimental import pallas as pl
from jax.experimental.pallas import tpu as pltpu


def _round_up(n, m):
    return ((n + m - 1) // m) * m


def _layout(P, H):
    """Sublane-aligned row offsets for the packed weight slab."""
    P8 = _round_up(max(P, 1), 8)
    H8 = _round_up(H, 8)
    W = max(H, P)
    o_w1 = 0
    o_w2 = P8
    o_w3 = P8 + H8
    o_we1 = P8 + 2 * H8
    R = 2 * P8 + 2 * H8
    return P8, H8, W, R, (o_w1, o_w2, o_w3, o_we1)


def _vpu_matmul(x, w):
    """Small matmul on the VPU: x (B, K) @ w (K, N) as K unrolled broadcast-FMAs.

    For K / N far below the MXU tile width this avoids the MXU round-trip
    (systolic fill + sequential result-FIFO pop on v5e/v6e).  K is a small
    static Python int, so the loop fully unrolls at trace time.
    """
    K = w.shape[0]
    acc = x[:, 0:1] * w[0:1, :]
    for k in range(1, K):
        acc = acc + x[:, k:k + 1] * w[k:k + 1, :]
    return acc


def _hyperparam_opt_kernel(x_ref, w_ref, c_ref, pred_ref, value_ref, *, P, H, offs):
    o_w1, o_w2, o_w3, o_we1 = offs

    x = x_ref[...]                                   # (TB, P) f32

    # Static views into the packed weight slab (row offsets are multiples of 8).
    w1 = w_ref[o_w1:o_w1 + P, :H]                    # (P, H)
    w2 = w_ref[o_w2:o_w2 + H, :H]                    # (H, H)
    w3 = w_ref[o_w3:o_w3 + H, :P]                    # (H, P)
    we1 = w_ref[o_we1:o_we1 + P, :H]                 # (P, H)

    # Static rows of the packed bias/constant slab.
    b1 = c_ref[0:1, :H]                              # (1, H)
    b2 = c_ref[1:2, :H]                              # (1, H)
    b3 = c_ref[2:3, :P]                              # (1, P)
    be1 = c_ref[3:4, :H]                             # (1, H)
    we2 = c_ref[4:5, :H]                             # (1, H)  value-head weight row
    be2 = c_ref[5:6, 0:1]                            # (1, 1)

    # ---- param_predictor: Linear -> ReLU -> Linear -> ReLU -> Linear ----
    # K = P (tiny): VPU broadcast-FMAs, skip the MXU.
    h1 = jnp.maximum(_vpu_matmul(x, w1) + b1, 0.0)                         # (TB, H)
    # H x H hidden layer: the only matmul worth sending to the MXU.
    h2 = jnp.maximum(
        jnp.dot(h1, w2, preferred_element_type=jnp.float32) + b2, 0.0)     # (TB, H)
    # N = P (tiny) output layer: VPU.
    pred = _vpu_matmul(h2, w3) + b3                                        # (TB, P)

    # ---- value_estimator(pred): Linear -> ReLU -> Linear(H, 1) ----
    he = jnp.maximum(_vpu_matmul(pred, we1) + be1, 0.0)                    # (TB, H)
    # (H, 1) projection on the VPU: elementwise mul + lane reduction (XLU).
    value = jnp.sum(he * we2, axis=-1, keepdims=True) + be2                # (TB, 1)

    pred_ref[...] = pred.astype(pred_ref.dtype)
    value_ref[...] = value.astype(value_ref.dtype)


def pack_params(p, P, H):
    """Pack the 4 weight matrices and the 6 tiny row operands into two slabs."""
    _, _, W, R, (o_w1, o_w2, o_w3, o_we1) = _layout(P, H)

    w_slab = jnp.zeros((R, W), jnp.float32)
    w_slab = w_slab.at[o_w1:o_w1 + P, :H].set(p["w1"])
    w_slab = w_slab.at[o_w2:o_w2 + H, :H].set(p["w2"])
    w_slab = w_slab.at[o_w3:o_w3 + H, :P].set(p["w3"])
    w_slab = w_slab.at[o_we1:o_we1 + P, :H].set(p["we1"])

    c_slab = jnp.zeros((8, W), jnp.float32)
    c_slab = c_slab.at[0, :H].set(p["b1"][0])
    c_slab = c_slab.at[1, :H].set(p["b2"][0])
    c_slab = c_slab.at[2, :P].set(p["b3"][0])
    c_slab = c_slab.at[3, :H].set(p["be1"][0])
    c_slab = c_slab.at[4, :H].set(p["we2_row"][0])
    c_slab = c_slab.at[5, 0].set(p["be2"][0, 0])
    return w_slab, c_slab


def hyperparameter_optimization_forward(current_params, params, *, batch_tile=None):
    """Returns (predicted_params [B, P], value [B, 1])."""
    P, H = params["P"], params["H"]
    w_slab, c_slab = params["w_slab"], params["c_slab"]

    B, Pin = current_params.shape
    assert Pin == P, "input feature dim must equal len(param_space)"
    _, _, _, _, offs = _layout(P, H)

    # Tile heuristic: one grid step for small/medium batches (minimal fixed
    # overhead); very large batches use 2048-row tiles so the parallel grid
    # axis has >=2 steps that Mosaic can shard across v7x's two TensorCores.
    # Per-tile VMEM footprint (lane-padded blocks, double-buffered) stays well
    # under the default scoped VMEM limit on all of v5e/v6e/v7x.
    if batch_tile is None:
        batch_tile = B if B <= 2048 else 2048

    Bp = _round_up(B, batch_tile)
    x = current_params
    if Bp != B:
        x = jnp.pad(x, ((0, Bp - B), (0, 0)))
    num_tiles = Bp // batch_tile

    kernel = functools.partial(_hyperparam_opt_kernel, P=P, H=H, offs=offs)

    in_specs = [
        pl.BlockSpec((batch_tile, P), lambda i: (i, 0)),   # x tile
        pl.BlockSpec(w_slab.shape, lambda i: (0, 0)),      # packed weight slab
        pl.BlockSpec(c_slab.shape, lambda i: (0, 0)),      # packed bias slab
    ]
    out_specs = (
        pl.BlockSpec((batch_tile, P), lambda i: (i, 0)),   # predicted params
        pl.BlockSpec((batch_tile, 1), lambda i: (i, 0)),   # value
    )
    out_shape = (
        jax.ShapeDtypeStruct((Bp, P), jnp.float32),
        jax.ShapeDtypeStruct((Bp, 1), jnp.float32),
    )

    pred, value = pl.pallas_call(
        kernel,
        out_shape=out_shape,
        grid_spec=pltpu.PrefetchScalarGridSpec(
            num_scalar_prefetch=0,
            grid=(num_tiles,),
            in_specs=in_specs,
            out_specs=out_specs,
        ),
        compiler_params=pltpu.CompilerParams(
            dimension_semantics=("parallel",),
        ),
    )(x, w_slab, c_slab)

    if Bp != B:
        pred = pred[:B]
        value = value[:B]
    return pred, value


def init_params(key, num_params, hidden_dim):
    """Mimics PyTorch nn.Linear default init (uniform +-1/sqrt(fan_in)).
    Weights stored as (in_features, out_features); we2 kept as a (1, H) row.
    Also builds the packed weight/bias slabs consumed by the kernel."""
    def linear(k, fan_in, fan_out):
        kw, kb = jax.random.split(k)
        bound = 1.0 / jnp.sqrt(fan_in)
        w = jax.random.uniform(kw, (fan_in, fan_out), jnp.float32, -bound, bound)
        b = jax.random.uniform(kb, (1, fan_out), jnp.float32, -bound, bound)
        return w, b

    ks = jax.random.split(key, 5)
    P, H = num_params, hidden_dim
    w1, b1 = linear(ks[0], P, H)
    w2, b2 = linear(ks[1], H, H)
    w3, b3 = linear(ks[2], H, P)
    we1, be1 = linear(ks[3], P, H)
    we2, be2 = linear(ks[4], H, 1)          # we2: (H, 1)

    params = dict(
        w1=w1, b1=b1, w2=w2, b2=b2, w3=w3, b3=b3,
        we1=we1, be1=be1,
        we2_row=we2.T,                      # (1, H) row for the VPU reduction
        be2=be2,                            # (1, 1)
        P=P, H=H,
    )
    w_slab, c_slab = pack_params(params, P, H)
    params["w_slab"] = w_slab
    params["c_slab"] = c_slab
    return params


def reference_forward(x, p):
    hi = jax.lax.Precision.HIGHEST
    h = jnp.maximum(jnp.dot(x, p["w1"], precision=hi) + p["b1"], 0.0)
    h = jnp.maximum(jnp.dot(h, p["w2"], precision=hi) + p["b2"], 0.0)
    pred = jnp.dot(h, p["w3"], precision=hi) + p["b3"]
    he = jnp.maximum(jnp.dot(pred, p["we1"], precision=hi) + p["be1"], 0.0)
    value = jnp.dot(he, p["we2_row"].T, precision=hi) + p["be2"]
    return pred, value


if __name__ == "__main__":
    NUM_PARAMS = 8      # len(param_space)
    HIDDEN_DIM = 32
    BATCH = 16

    key = jax.random.PRNGKey(0)
    k_params, k_x = jax.random.split(key)
    params = init_params(k_params, NUM_PARAMS, HIDDEN_DIM)
    current = jax.random.uniform(k_x, (BATCH, NUM_PARAMS), jnp.float32)

    pred, value = hyperparameter_optimization_forward(current, params)
    jax.block_until_ready((pred, value))

    pred_ref, value_ref = reference_forward(current, params)
    assert pred.shape == (BATCH, NUM_PARAMS) and value.shape == (BATCH, 1)
    assert jnp.allclose(pred, pred_ref, atol=1e-4, rtol=1e-4), (
        "pred mismatch, max abs diff %e" % float(jnp.max(jnp.abs(pred - pred_ref))))
    assert jnp.allclose(value, value_ref, atol=1e-4, rtol=1e-4), (
        "value mismatch, max abs diff %e" % float(jnp.max(jnp.abs(value - value_ref))))

    print("KERNEL_OK")
</pallas_src>

<mosaic_0001>
module attributes {stable_mosaic.version = 11 : i64} {
  func.func @_hyperparam_opt_kernel(%arg0: i32, %arg1: memref<16x8xf32, #tpu.memory_space<vmem>>, %arg2: memref<80x32xf32, #tpu.memory_space<vmem>>, %arg3: memref<8x32xf32, #tpu.memory_space<vmem>>, %arg4: memref<16x8xf32, #tpu.memory_space<vmem>>, %arg5: memref<16x1xf32, #tpu.memory_space<vmem>>) attributes {dimension_semantics = [#tpu.dimension_semantics<parallel>], iteration_bounds = array<i64: 1>, scalar_prefetch = 0 : i64, scratch_operands = 0 : i64, tpu.core_type = #tpu.core_type<tc>, window_params = [{transform_indices = @transform_0, window_bounds = array<i64: 16, 8>}, {pipeline_mode = #tpu.pipeline_mode<synchronous>, transform_indices = @transform_1, window_bounds = array<i64: 80, 32>}, {pipeline_mode = #tpu.pipeline_mode<synchronous>, transform_indices = @transform_2, window_bounds = array<i64: 8, 32>}, {transform_indices = @transform_3, window_bounds = array<i64: 16, 8>}, {transform_indices = @transform_4, window_bounds = array<i64: 16, 1>}]} {
    %c0 = arith.constant 0 : index
    %c0_0 = arith.constant 0 : index
    %0 = vector.load %arg1[%c0, %c0_0] : memref<16x8xf32, #tpu.memory_space<vmem>>, vector<16x8xf32>
    %c0_1 = arith.constant 0 : index
    %c0_2 = arith.constant 0 : index
    %1 = vector.load %arg2[%c0_1, %c0_2] : memref<80x32xf32, #tpu.memory_space<vmem>>, vector<8x32xf32>
    %c8 = arith.constant 8 : index
    %c0_3 = arith.constant 0 : index
    %2 = vector.load %arg2[%c8, %c0_3] : memref<80x32xf32, #tpu.memory_space<vmem>>, vector<32x32xf32>
    %c40 = arith.constant 40 : index
    %c0_4 = arith.constant 0 : index
    %3 = vector.load %arg2[%c40, %c0_4] : memref<80x32xf32, #tpu.memory_space<vmem>>, vector<32x8xf32>
    %c72 = arith.constant 72 : index
    %c0_5 = arith.constant 0 : index
    %4 = vector.load %arg2[%c72, %c0_5] : memref<80x32xf32, #tpu.memory_space<vmem>>, vector<8x32xf32>
    %c0_6 = arith.constant 0 : index
    %c0_7 = arith.constant 0 : index
    %5 = vector.load %arg3[%c0_6, %c0_7] : memref<8x32xf32, #tpu.memory_space<vmem>>, vector<1x32xf32>
    %c1 = arith.constant 1 : index
    %c0_8 = arith.constant 0 : index
    %6 = vector.load %arg3[%c1, %c0_8] : memref<8x32xf32, #tpu.memory_space<vmem>>, vector<1x32xf32>
    %c2 = arith.constant 2 : index
    %c0_9 = arith.constant 0 : index
    %7 = vector.load %arg3[%c2, %c0_9] : memref<8x32xf32, #tpu.memory_space<vmem>>, vector<1x8xf32>
    %c3 = arith.constant 3 : index
    %c0_10 = arith.constant 0 : index
    %8 = vector.load %arg3[%c3, %c0_10] : memref<8x32xf32, #tpu.memory_space<vmem>>, vector<1x32xf32>
    %c4 = arith.constant 4 : index
    %c0_11 = arith.constant 0 : index
    %9 = vector.load %arg3[%c4, %c0_11] : memref<8x32xf32, #tpu.memory_space<vmem>>, vector<1x32xf32>
    %c5 = arith.constant 5 : index
    %c0_12 = arith.constant 0 : index
    %10 = vector.load %arg3[%c5, %c0_12] : memref<8x32xf32, #tpu.memory_space<vmem>>, vector<1x1xf32>
    %11 = vector.extract_strided_slice %0 {offsets = [0, 0], sizes = [16, 1], strides = [1, 1]} : vector<16x8xf32> to vector<16x1xf32>
    %12 = vector.extract_strided_slice %1 {offsets = [0, 0], sizes = [1, 32], strides = [1, 1]} : vector<8x32xf32> to vector<1x32xf32>
    %13 = vector.broadcast %11 : vector<16x1xf32> to vector<16x32xf32>
    %14 = vector.broadcast %12 : vector<1x32xf32> to vector<16x32xf32>
    %15 = arith.mulf %13, %14 : vector<16x32xf32>
    %16 = vector.extract_strided_slice %0 {offsets = [0, 1], sizes = [16, 1], strides = [1, 1]} : vector<16x8xf32> to vector<16x1xf32>
    %17 = vector.extract_strided_slice %1 {offsets = [1, 0], sizes = [1, 32], strides = [1, 1]} : vector<8x32xf32> to vector<1x32xf32>
    %18 = vector.broadcast %16 : vector<16x1xf32> to vector<16x32xf32>
    %19 = vector.broadcast %17 : vector<1x32xf32> to vector<16x32xf32>
    %20 = arith.mulf %18, %19 : vector<16x32xf32>
    %21 = arith.addf %15, %20 : vector<16x32xf32>
    %22 = vector.extract_strided_slice %0 {offsets = [0, 2], sizes = [16, 1], strides = [1, 1]} : vector<16x8xf32> to vector<16x1xf32>
    %23 = vector.extract_strided_slice %1 {offsets = [2, 0], sizes = [1, 32], strides = [1, 1]} : vector<8x32xf32> to vector<1x32xf32>
    %24 = vector.broadcast %22 : vector<16x1xf32> to vector<16x32xf32>
    %25 = vector.broadcast %23 : vector<1x32xf32> to vector<16x32xf32>
    %26 = arith.mulf %24, %25 : vector<16x32xf32>
    %27 = arith.addf %21, %26 : vector<16x32xf32>
    %28 = vector.extract_strided_slice %0 {offsets = [0, 3], sizes = [16, 1], strides = [1, 1]} : vector<16x8xf32> to vector<16x1xf32>
    %29 = vector.extract_strided_slice %1 {offsets = [3, 0], sizes = [1, 32], strides = [1, 1]} : vector<8x32xf32> to vector<1x32xf32>
    %30 = vector.broadcast %28 : vector<16x1xf32> to vector<16x32xf32>
    %31 = vector.broadcast %29 : vector<1x32xf32> to vector<16x32xf32>
    %32 = arith.mulf %30, %31 : vector<16x32xf32>
    %33 = arith.addf %27, %32 : vector<16x32xf32>
    %34 = vector.extract_strided_slice %0 {offsets = [0, 4], sizes = [16, 1], strides = [1, 1]} : vector<16x8xf32> to vector<16x1xf32>
    %35 = vector.extract_strided_slice %1 {offsets = [4, 0], sizes = [1, 32], strides = [1, 1]} : vector<8x32xf32> to vector<1x32xf32>
    %36 = vector.broadcast %34 : vector<16x1xf32> to vector<16x32xf32>
    %37 = vector.broadcast %35 : vector<1x32xf32> to vector<16x32xf32>
    %38 = arith.mulf %36, %37 : vector<16x32xf32>
    %39 = arith.addf %33, %38 : vector<16x32xf32>
    %40 = vector.extract_strided_slice %0 {offsets = [0, 5], sizes = [16, 1], strides = [1, 1]} : vector<16x8xf32> to vector<16x1xf32>
    %41 = vector.extract_strided_slice %1 {offsets = [5, 0], sizes = [1, 32], strides = [1, 1]} : vector<8x32xf32> to vector<1x32xf32>
    %42 = vector.broadcast %40 : vector<16x1xf32> to vector<16x32xf32>
    %43 = vector.broadcast %41 : vector<1x32xf32> to vector<16x32xf32>
    %44 = arith.mulf %42, %43 : vector<16x32xf32>
    %45 = arith.addf %39, %44 : vector<16x32xf32>
    %46 = vector.extract_strided_slice %0 {offsets = [0, 6], sizes = [16, 1], strides = [1, 1]} : vector<16x8xf32> to vector<16x1xf32>
    %47 = vector.extract_strided_slice %1 {offsets = [6, 0], sizes = [1, 32], strides = [1, 1]} : vector<8x32xf32> to vector<1x32xf32>
    %48 = vector.broadcast %46 : vector<16x1xf32> to vector<16x32xf32>
    %49 = vector.broadcast %47 : vector<1x32xf32> to vector<16x32xf32>
    %50 = arith.mulf %48, %49 : vector<16x32xf32>
    %51 = arith.addf %45, %50 : vector<16x32xf32>
    %52 = vector.extract_strided_slice %0 {offsets = [0, 7], sizes = [16, 1], strides = [1, 1]} : vector<16x8xf32> to vector<16x1xf32>
    %53 = vector.extract_strided_slice %1 {offsets = [7, 0], sizes = [1, 32], strides = [1, 1]} : vector<8x32xf32> to vector<1x32xf32>
    %54 = vector.broadcast %52 : vector<16x1xf32> to vector<16x32xf32>
    %55 = vector.broadcast %53 : vector<1x32xf32> to vector<16x32xf32>
    %56 = arith.mulf %54, %55 : vector<16x32xf32>
    %57 = arith.addf %51, %56 : vector<16x32xf32>
    %58 = vector.broadcast %5 : vector<1x32xf32> to vector<16x32xf32>
    %59 = arith.addf %57, %58 : vector<16x32xf32>
    %cst = arith.constant 0.000000e+00 : f32
    %60 = vector.broadcast %cst : f32 to vector<16x32xf32>
    %61 = arith.maximumf %59, %60 : vector<16x32xf32>
    %cst_13 = arith.constant dense<0.000000e+00> : vector<16x32xf32>
    %62 = tpu.matmul %61, %2, %cst_13 {dimension_numbers = #tpu.dot_dimension_numbers<[1], [0], [0], [1], [0, 0, 1, 1], [], []>} : vector<16x32xf32>, vector<32x32xf32>, vector<16x32xf32> -> vector<16x32xf32>
    %63 = vector.broadcast %6 : vector<1x32xf32> to vector<16x32xf32>
    %64 = arith.addf %62, %63 : vector<16x32xf32>
    %cst_14 = arith.constant 0.000000e+00 : f32
    %65 = vector.broadcast %cst_14 : f32 to vector<16x32xf32>
    %66 = arith.maximumf %64, %65 : vector<16x32xf32>
    %67 = vector.extract_strided_slice %66 {offsets = [0, 0], sizes = [16, 1], strides = [1, 1]} : vector<16x32xf32> to vector<16x1xf32>
    %68 = vector.extract_strided_slice %3 {offsets = [0, 0], sizes = [1, 8], strides = [1, 1]} : vector<32x8xf32> to vector<1x8xf32>
    %69 = vector.broadcast %67 : vector<16x1xf32> to vector<16x8xf32>
    %70 = vector.broadcast %68 : vector<1x8xf32> to vector<16x8xf32>
    %71 = arith.mulf %69, %70 : vector<16x8xf32>
    %72 = vector.extract_strided_slice %66 {offsets = [0, 1], sizes = [16, 1], strides = [1, 1]} : vector<16x32xf32> to vector<16x1xf32>
    %73 = vector.extract_strided_slice %3 {offsets = [1, 0], sizes = [1, 8], strides = [1, 1]} : vector<32x8xf32> to vector<1x8xf32>
    %74 = vector.broadcast %72 : vector<16x1xf32> to vector<16x8xf32>
    %75 = vector.broadcast %73 : vector<1x8xf32> to vector<16x8xf32>
    %76 = arith.mulf %74, %75 : vector<16x8xf32>
    %77 = arith.addf %71, %76 : vector<16x8xf32>
    %78 = vector.extract_strided_slice %66 {offsets = [0, 2], sizes = [16, 1], strides = [1, 1]} : vector<16x32xf32> to vector<16x1xf32>
    %79 = vector.extract_strided_slice %3 {offsets = [2, 0], sizes = [1, 8], strides = [1, 1]} : vector<32x8xf32> to vector<1x8xf32>
    %80 = vector.broadcast %78 : vector<16x1xf32> to vector<16x8xf32>
    %81 = vector.broadcast %79 : vector<1x8xf32> to vector<16x8xf32>
    %82 = arith.mulf %80, %81 : vector<16x8xf32>
    %83 = arith.addf %77, %82 : vector<16x8xf32>
    %84 = vector.extract_strided_slice %66 {offsets = [0, 3], sizes = [16, 1], strides = [1, 1]} : vector<16x32xf32> to vector<16x1xf32>
    %85 = vector.extract_strided_slice %3 {offsets = [3, 0], sizes = [1, 8], strides = [1, 1]} : vector<32x8xf32> to vector<1x8xf32>
    %86 = vector.broadcast %84 : vector<16x1xf32> to vector<16x8xf32>
    %87 = vector.broadcast %85 : vector<1x8xf32> to vector<16x8xf32>
    %88 = arith.mulf %86, %87 : vector<16x8xf32>
    %89 = arith.addf %83, %88 : vector<16x8xf32>
    %90 = vector.extract_strided_slice %66 {offsets = [0, 4], sizes = [16, 1], strides = [1, 1]} : vector<16x32xf32> to vector<16x1xf32>
    %91 = vector.extract_strided_slice %3 {offsets = [4, 0], sizes = [1, 8], strides = [1, 1]} : vector<32x8xf32> to vector<1x8xf32>
    %92 = vector.broadcast %90 : vector<16x1xf32> to vector<16x8xf32>
    %93 = vector.broadcast %91 : vector<1x8xf32> to vector<16x8xf32>
    %94 = arith.mulf %92, %93 : vector<16x8xf32>
    %95 = arith.addf %89, %94 : vector<16x8xf32>
    %96 = vector.extract_strided_slice %66 {offsets = [0, 5], sizes = [16, 1], strides = [1, 1]} : vector<16x32xf32> to vector<16x1xf32>
    %97 = vector.extract_strided_slice %3 {offsets = [5, 0], sizes = [1, 8], strides = [1, 1]} : vector<32x8xf32> to vector<1x8xf32>
    %98 = vector.broadcast %96 : vector<16x1xf32> to vector<16x8xf32>
    %99 = vector.broadcast %97 : vector<1x8xf32> to vector<16x8xf32>
    %100 = arith.mulf %98, %99 : vector<16x8xf32>
    %101 = arith.addf %95, %100 : vector<16x8xf32>
    %102 = vector.extract_strided_slice %66 {offsets = [0, 6], sizes = [16, 1], strides = [1, 1]} : vector<16x32xf32> to vector<16x1xf32>
    %103 = vector.extract_strided_slice %3 {offsets = [6, 0], sizes = [1, 8], strides = [1, 1]} : vector<32x8xf32> to vector<1x8xf32>
    %104 = vector.broadcast %102 : vector<16x1xf32> to vector<16x8xf32>
    %105 = vector.broadcast %103 : vector<1x8xf32> to vector<16x8xf32>
    %106 = arith.mulf %104, %105 : vector<16x8xf32>
    %107 = arith.addf %101, %106 : vector<16x8xf32>
    %108 = vector.extract_strided_slice %66 {offsets = [0, 7], sizes = [16, 1], strides = [1, 1]} : vector<16x32xf32> to vector<16x1xf32>
    %109 = vector.extract_strided_slice %3 {offsets = [7, 0], sizes = [1, 8], strides = [1, 1]} : vector<32x8xf32> to vector<1x8xf32>
    %110 = vector.broadcast %108 : vector<16x1xf32> to vector<16x8xf32>
    %111 = vector.broadcast %109 : vector<1x8xf32> to vector<16x8xf32>
    %112 = arith.mulf %110, %111 : vector<16x8xf32>
    %113 = arith.addf %107, %112 : vector<16x8xf32>
    %114 = vector.extract_strided_slice %66 {offsets = [0, 8], sizes = [16, 1], strides = [1, 1]} : vector<16x32xf32> to vector<16x1xf32>
    %115 = vector.extract_strided_slice %3 {offsets = [8, 0], sizes = [1, 8], strides = [1, 1]} : vector<32x8xf32> to vector<1x8xf32>
    %116 = vector.broadcast %114 : vector<16x1xf32> to vector<16x8xf32>
    %117 = vector.broadcast %115 : vector<1x8xf32> to vector<16x8xf32>
    %118 = arith.mulf %116, %117 : vector<16x8xf32>
    %119 = arith.addf %113, %118 : vector<16x8xf32>
    %120 = vector.extract_strided_slice %66 {offsets = [0, 9], sizes = [16, 1], strides = [1, 1]} : vector<16x32xf32> to vector<16x1xf32>
    %121 = vector.extract_strided_slice %3 {offsets = [9, 0], sizes = [1, 8], strides = [1, 1]} : vector<32x8xf32> to vector<1x8xf32>
    %122 = vector.broadcast %120 : vector<16x1xf32> to vector<16x8xf32>
    %123 = vector.broadcast %121 : vector<1x8xf32> to vector<16x8xf32>
    %124 = arith.mulf %122, %123 : vector<16x8xf32>
    %125 = arith.addf %119, %124 : vector<16x8xf32>
    %126 = vector.extract_strided_slice %66 {offsets = [0, 10], sizes = [16, 1], strides = [1, 1]} : vector<16x32xf32> to vector<16x1xf32>
    %127 = vector.extract_strided_slice %3 {offsets = [10, 0], sizes = [1, 8], strides = [1, 1]} : vector<32x8xf32> to vector<1x8xf32>
    %128 = vector.broadcast %126 : vector<16x1xf32> to vector<16x8xf32>
    %129 = vector.broadcast %127 : vector<1x8xf32> to vector<16x8xf32>
    %130 = arith.mulf %128, %129 : vector<16x8xf32>
    %131 = arith.addf %125, %130 : vector<16x8xf32>
    %132 = vector.extract_strided_slice %66 {offsets = [0, 11], sizes = [16, 1], strides = [1, 1]} : vector<16x32xf32> to vector<16x1xf32>
    %133 = vector.extract_strided_slice %3 {offsets = [11, 0], sizes = [1, 8], strides = [1, 1]} : vector<32x8xf32> to vector<1x8xf32>
    %134 = vector.broadcast %132 : vector<16x1xf32> to vector<16x8xf32>
    %135 = vector.broadcast %133 : vector<1x8xf32> to vector<16x8xf32>
    %136 = arith.mulf %134, %135 : vector<16x8xf32>
    %137 = arith.addf %131, %136 : vector<16x8xf32>
    %138 = vector.extract_strided_slice %66 {offsets = [0, 12], sizes = [16, 1], strides = [1, 1]} : vector<16x32xf32> to vector<16x1xf32>
    %139 = vector.extract_strided_slice %3 {offsets = [12, 0], sizes = [1, 8], strides = [1, 1]} : vector<32x8xf32> to vector<1x8xf32>
    %140 = vector.broadcast %138 : vector<16x1xf32> to vector<16x8xf32>
    %141 = vector.broadcast %139 : vector<1x8xf32> to vector<16x8xf32>
    %142 = arith.mulf %140, %141 : vector<16x8xf32>
    %143 = arith.addf %137, %142 : vector<16x8xf32>
    %144 = vector.extract_strided_slice %66 {offsets = [0, 13], sizes = [16, 1], strides = [1, 1]} : vector<16x32xf32> to vector<16x1xf32>
    %145 = vector.extract_strided_slice %3 {offsets = [13, 0], sizes = [1, 8], strides = [1, 1]} : vector<32x8xf32> to vector<1x8xf32>
    %146 = vector.broadcast %144 : vector<16x1xf32> to vector<16x8xf32>
    %147 = vector.broadcast %145 : vector<1x8xf32> to vector<16x8xf32>
    %148 = arith.mulf %146, %147 : vector<16x8xf32>
    %149 = arith.addf %143, %148 : vector<16x8xf32>
    %150 = vector.extract_strided_slice %66 {offsets = [0, 14], sizes = [16, 1], strides = [1, 1]} : vector<16x32xf32> to vector<16x1xf32>
    %151 = vector.extract_strided_slice %3 {offsets = [14, 0], sizes = [1, 8], strides = [1, 1]} : vector<32x8xf32> to vector<1x8xf32>
    %152 = vector.broadcast %150 : vector<16x1xf32> to vector<16x8xf32>
    %153 = vector.broadcast %151 : vector<1x8xf32> to vector<16x8xf32>
    %154 = arith.mulf %152, %153 : vector<16x8xf32>
    %155 = arith.addf %149, %154 : vector<16x8xf32>
    %156 = vector.extract_strided_slice %66 {offsets = [0, 15], sizes = [16, 1], strides = [1, 1]} : vector<16x32xf32> to vector<16x1xf32>
    %157 = vector.extract_strided_slice %3 {offsets = [15, 0], sizes = [1, 8], strides = [1, 1]} : vector<32x8xf32> to vector<1x8xf32>
    %158 = vector.broadcast %156 : vector<16x1xf32> to vector<16x8xf32>
    %159 = vector.broadcast %157 : vector<1x8xf32> to vector<16x8xf32>
    %160 = arith.mulf %158, %159 : vector<16x8xf32>
    %161 = arith.addf %155, %160 : vector<16x8xf32>
    %162 = vector.extract_strided_slice %66 {offsets = [0, 16], sizes = [16, 1], strides = [1, 1]} : vector<16x32xf32> to vector<16x1xf32>
    %163 = vector.extract_strided_slice %3 {offsets = [16, 0], sizes = [1, 8], strides = [1, 1]} : vector<32x8xf32> to vector<1x8xf32>
    %164 = vector.broadcast %162 : vector<16x1xf32> to vector<16x8xf32>
    %165 = vector.broadcast %163 : vector<1x8xf32> to vector<16x8xf32>
    %166 = arith.mulf %164, %165 : vector<16x8xf32>
    %167 = arith.addf %161, %166 : vector<16x8xf32>
    %168 = vector.extract_strided_slice %66 {offsets = [0, 17], sizes = [16, 1], strides = [1, 1]} : vector<16x32xf32> to vector<16x1xf32>
    %169 = vector.extract_strided_slice %3 {offsets = [17, 0], sizes = [1, 8], strides = [1, 1]} : vector<32x8xf32> to vector<1x8xf32>
    %170 = vector.broadcast %168 : vector<16x1xf32> to vector<16x8xf32>
    %171 = vector.broadcast %169 : vector<1x8xf32> to vector<16x8xf32>
    %172 = arith.mulf %170, %171 : vector<16x8xf32>
    %173 = arith.addf %167, %172 : vector<16x8xf32>
    %174 = vector.extract_strided_slice %66 {offsets = [0, 18], sizes = [16, 1], strides = [1, 1]} : vector<16x32xf32> to vector<16x1xf32>
    %175 = vector.extract_strided_slice %3 {offsets = [18, 0], sizes = [1, 8], strides = [1, 1]} : vector<32x8xf32> to vector<1x8xf32>
    %176 = vector.broadcast %174 : vector<16x1xf32> to vector<16x8xf32>
    %177 = vector.broadcast %175 : vector<1x8xf32> to vector<16x8xf32>
    %178 = arith.mulf %176, %177 : vector<16x8xf32>
    %179 = arith.addf %173, %178 : vector<16x8xf32>
    %180 = vector.extract_strided_slice %66 {offsets = [0, 19], sizes = [16, 1], strides = [1, 1]} : vector<16x32xf32> to vector<16x1xf32>
    %181 = vector.extract_strided_slice %3 {offsets = [19, 0], sizes = [1, 8], strides = [1, 1]} : vector<32x8xf32> to vector<1x8xf32>
    %182 = vector.broadcast %180 : vector<16x1xf32> to vector<16x8xf32>
    %183 = vector.broadcast %181 : vector<1x8xf32> to vector<16x8xf32>
    %184 = arith.mulf %182, %183 : vector<16x8xf32>
    %185 = arith.addf %179, %184 : vector<16x8xf32>
    %186 = vector.extract_strided_slice %66 {offsets = [0, 20], sizes = [16, 1], strides = [1, 1]} : vector<16x32xf32> to vector<16x1xf32>
    %187 = vector.extract_strided_slice %3 {offsets = [20, 0], sizes = [1, 8], strides = [1, 1]} : vector<32x8xf32> to vector<1x8xf32>
    %188 = vector.broadcast %186 : vector<16x1xf32> to vector<16x8xf32>
    %189 = vector.broadcast %187 : vector<1x8xf32> to vector<16x8xf32>
    %190 = arith.mulf %188, %189 : vector<16x8xf32>
    %191 = arith.addf %185, %190 : vector<16x8xf32>
    %192 = vector.extract_strided_slice %66 {offsets = [0, 21], sizes = [16, 1], strides = [1, 1]} : vector<16x32xf32> to vector<16x1xf32>
    %193 = vector.extract_strided_slice %3 {offsets = [21, 0], sizes = [1, 8], strides = [1, 1]} : vector<32x8xf32> to vector<1x8xf32>
    %194 = vector.broadcast %192 : vector<16x1xf32> to vector<16x8xf32>
    %195 = vector.broadcast %193 : vector<1x8xf32> to vector<16x8xf32>
    %196 = arith.mulf %194, %195 : vector<16x8xf32>
    %197 = arith.addf %191, %196 : vector<16x8xf32>
    %198 = vector.extract_strided_slice %66 {offsets = [0, 22], sizes = [16, 1], strides = [1, 1]} : vector<16x32xf32> to vector<16x1xf32>
    %199 = vector.extract_strided_slice %3 {offsets = [22, 0], sizes = [1, 8], strides = [1, 1]} : vector<32x8xf32> to vector<1x8xf32>
    %200 = vector.broadcast %198 : vector<16x1xf32> to vector<16x8xf32>
    %201 = vector.broadcast %199 : vector<1x8xf32> to vector<16x8xf32>
    %202 = arith.mulf %200, %201 : vector<16x8xf32>
    %203 = arith.addf %197, %202 : vector<16x8xf32>
    %204 = vector.extract_strided_slice %66 {offsets = [0, 23], sizes = [16, 1], strides = [1, 1]} : vector<16x32xf32> to vector<16x1xf32>
    %205 = vector.extract_strided_slice %3 {offsets = [23, 0], sizes = [1, 8], strides = [1, 1]} : vector<32x8xf32> to vector<1x8xf32>
    %206 = vector.broadcast %204 : vector<16x1xf32> to vector<16x8xf32>
    %207 = vector.broadcast %205 : vector<1x8xf32> to vector<16x8xf32>
    %208 = arith.mulf %206, %207 : vector<16x8xf32>
    %209 = arith.addf %203, %208 : vector<16x8xf32>
    %210 = vector.extract_strided_slice %66 {offsets = [0, 24], sizes = [16, 1], strides = [1, 1]} : vector<16x32xf32> to vector<16x1xf32>
    %211 = vector.extract_strided_slice %3 {offsets = [24, 0], sizes = [1, 8], strides = [1, 1]} : vector<32x8xf32> to vector<1x8xf32>
    %212 = vector.broadcast %210 : vector<16x1xf32> to vector<16x8xf32>
    %213 = vector.broadcast %211 : vector<1x8xf32> to vector<16x8xf32>
    %214 = arith.mulf %212, %213 : vector<16x8xf32>
    %215 = arith.addf %209, %214 : vector<16x8xf32>
    %216 = vector.extract_strided_slice %66 {offsets = [0, 25], sizes = [16, 1], strides = [1, 1]} : vector<16x32xf32> to vector<16x1xf32>
    %217 = vector.extract_strided_slice %3 {offsets = [25, 0], sizes = [1, 8], strides = [1, 1]} : vector<32x8xf32> to vector<1x8xf32>
    %218 = vector.broadcast %216 : vector<16x1xf32> to vector<16x8xf32>
    %219 = vector.broadcast %217 : vector<1x8xf32> to vector<16x8xf32>
    %220 = arith.mulf %218, %219 : vector<16x8xf32>
    %221 = arith.addf %215, %220 : vector<16x8xf32>
    %222 = vector.extract_strided_slice %66 {offsets = [0, 26], sizes = [16, 1], strides = [1, 1]} : vector<16x32xf32> to vector<16x1xf32>
    %223 = vector.extract_strided_slice %3 {offsets = [26, 0], sizes = [1, 8], strides = [1, 1]} : vector<32x8xf32> to vector<1x8xf32>
    %224 = vector.broadcast %222 : vector<16x1xf32> to vector<16x8xf32>
    %225 = vector.broadcast %223 : vector<1x8xf32> to vector<16x8xf32>
    %226 = arith.mulf %224, %225 : vector<16x8xf32>
    %227 = arith.addf %221, %226 : vector<16x8xf32>
    %228 = vector.extract_strided_slice %66 {offsets = [0, 27], sizes = [16, 1], strides = [1, 1]} : vector<16x32xf32> to vector<16x1xf32>
    %229 = vector.extract_strided_slice %3 {offsets = [27, 0], sizes = [1, 8], strides = [1, 1]} : vector<32x8xf32> to vector<1x8xf32>
    %230 = vector.broadcast %228 : vector<16x1xf32> to vector<16x8xf32>
    %231 = vector.broadcast %229 : vector<1x8xf32> to vector<16x8xf32>
    %232 = arith.mulf %230, %231 : vector<16x8xf32>
    %233 = arith.addf %227, %232 : vector<16x8xf32>
    %234 = vector.extract_strided_slice %66 {offsets = [0, 28], sizes = [16, 1], strides = [1, 1]} : vector<16x32xf32> to vector<16x1xf32>
    %235 = vector.extract_strided_slice %3 {offsets = [28, 0], sizes = [1, 8], strides = [1, 1]} : vector<32x8xf32> to vector<1x8xf32>
    %236 = vector.broadcast %234 : vector<16x1xf32> to vector<16x8xf32>
    %237 = vector.broadcast %235 : vector<1x8xf32> to vector<16x8xf32>
    %238 = arith.mulf %236, %237 : vector<16x8xf32>
    %239 = arith.addf %233, %238 : vector<16x8xf32>
    %240 = vector.extract_strided_slice %66 {offsets = [0, 29], sizes = [16, 1], strides = [1, 1]} : vector<16x32xf32> to vector<16x1xf32>
    %241 = vector.extract_strided_slice %3 {offsets = [29, 0], sizes = [1, 8], strides = [1, 1]} : vector<32x8xf32> to vector<1x8xf32>
    %242 = vector.broadcast %240 : vector<16x1xf32> to vector<16x8xf32>
    %243 = vector.broadcast %241 : vector<1x8xf32> to vector<16x8xf32>
    %244 = arith.mulf %242, %243 : vector<16x8xf32>
    %245 = arith.addf %239, %244 : vector<16x8xf32>
    %246 = vector.extract_strided_slice %66 {offsets = [0, 30], sizes = [16, 1], strides = [1, 1]} : vector<16x32xf32> to vector<16x1xf32>
    %247 = vector.extract_strided_slice %3 {offsets = [30, 0], sizes = [1, 8], strides = [1, 1]} : vector<32x8xf32> to vector<1x8xf32>
    %248 = vector.broadcast %246 : vector<16x1xf32> to vector<16x8xf32>
    %249 = vector.broadcast %247 : vector<1x8xf32> to vector<16x8xf32>
    %250 = arith.mulf %248, %249 : vector<16x8xf32>
    %251 = arith.addf %245, %250 : vector<16x8xf32>
    %252 = vector.extract_strided_slice %66 {offsets = [0, 31], sizes = [16, 1], strides = [1, 1]} : vector<16x32xf32> to vector<16x1xf32>
    %253 = vector.extract_strided_slice %3 {offsets = [31, 0], sizes = [1, 8], strides = [1, 1]} : vector<32x8xf32> to vector<1x8xf32>
    %254 = vector.broadcast %252 : vector<16x1xf32> to vector<16x8xf32>
    %255 = vector.broadcast %253 : vector<1x8xf32> to vector<16x8xf32>
    %256 = arith.mulf %254, %255 : vector<16x8xf32>
    %257 = arith.addf %251, %256 : vector<16x8xf32>
    %258 = vector.broadcast %7 : vector<1x8xf32> to vector<16x8xf32>
    %259 = arith.addf %257, %258 : vector<16x8xf32>
    %260 = vector.extract_strided_slice %259 {offsets = [0, 0], sizes = [16, 1], strides = [1, 1]} : vector<16x8xf32> to vector<16x1xf32>
    %261 = vector.extract_strided_slice %4 {offsets = [0, 0], sizes = [1, 32], strides = [1, 1]} : vector<8x32xf32> to vector<1x32xf32>
    %262 = vector.broadcast %260 : vector<16x1xf32> to vector<16x32xf32>
    %263 = vector.broadcast %261 : vector<1x32xf32> to vector<16x32xf32>
    %264 = arith.mulf %262, %263 : vector<16x32xf32>
    %265 = vector.extract_strided_slice %259 {offsets = [0, 1], sizes = [16, 1], strides = [1, 1]} : vector<16x8xf32> to vector<16x1xf32>
    %266 = vector.extract_strided_slice %4 {offsets = [1, 0], sizes = [1, 32], strides = [1, 1]} : vector<8x32xf32> to vector<1x32xf32>
    %267 = vector.broadcast %265 : vector<16x1xf32> to vector<16x32xf32>
    %268 = vector.broadcast %266 : vector<1x32xf32> to vector<16x32xf32>
    %269 = arith.mulf %267, %268 : vector<16x32xf32>
    %270 = arith.addf %264, %269 : vector<16x32xf32>
    %271 = vector.extract_strided_slice %259 {offsets = [0, 2], sizes = [16, 1], strides = [1, 1]} : vector<16x8xf32> to vector<16x1xf32>
    %272 = vector.extract_strided_slice %4 {offsets = [2, 0], sizes = [1, 32], strides = [1, 1]} : vector<8x32xf32> to vector<1x32xf32>
    %273 = vector.broadcast %271 : vector<16x1xf32> to vector<16x32xf32>
    %274 = vector.broadcast %272 : vector<1x32xf32> to vector<16x32xf32>
    %275 = arith.mulf %273, %274 : vector<16x32xf32>
    %276 = arith.addf %270, %275 : vector<16x32xf32>
    %277 = vector.extract_strided_slice %259 {offsets = [0, 3], sizes = [16, 1], strides = [1, 1]} : vector<16x8xf32> to vector<16x1xf32>
    %278 = vector.extract_strided_slice %4 {offsets = [3, 0], sizes = [1, 32], strides = [1, 1]} : vector<8x32xf32> to vector<1x32xf32>
    %279 = vector.broadcast %277 : vector<16x1xf32> to vector<16x32xf32>
    %280 = vector.broadcast %278 : vector<1x32xf32> to vector<16x32xf32>
    %281 = arith.mulf %279, %280 : vector<16x32xf32>
    %282 = arith.addf %276, %281 : vector<16x32xf32>
    %283 = vector.extract_strided_slice %259 {offsets = [0, 4], sizes = [16, 1], strides = [1, 1]} : vector<16x8xf32> to vector<16x1xf32>
    %284 = vector.extract_strided_slice %4 {offsets = [4, 0], sizes = [1, 32], strides = [1, 1]} : vector<8x32xf32> to vector<1x32xf32>
    %285 = vector.broadcast %283 : vector<16x1xf32> to vector<16x32xf32>
    %286 = vector.broadcast %284 : vector<1x32xf32> to vector<16x32xf32>
    %287 = arith.mulf %285, %286 : vector<16x32xf32>
    %288 = arith.addf %282, %287 : vector<16x32xf32>
    %289 = vector.extract_strided_slice %259 {offsets = [0, 5], sizes = [16, 1], strides = [1, 1]} : vector<16x8xf32> to vector<16x1xf32>
    %290 = vector.extract_strided_slice %4 {offsets = [5, 0], sizes = [1, 32], strides = [1, 1]} : vector<8x32xf32> to vector<1x32xf32>
    %291 = vector.broadcast %289 : vector<16x1xf32> to vector<16x32xf32>
    %292 = vector.broadcast %290 : vector<1x32xf32> to vector<16x32xf32>
    %293 = arith.mulf %291, %292 : vector<16x32xf32>
    %294 = arith.addf %288, %293 : vector<16x32xf32>
    %295 = vector.extract_strided_slice %259 {offsets = [0, 6], sizes = [16, 1], strides = [1, 1]} : vector<16x8xf32> to vector<16x1xf32>
    %296 = vector.extract_strided_slice %4 {offsets = [6, 0], sizes = [1, 32], strides = [1, 1]} : vector<8x32xf32> to vector<1x32xf32>
    %297 = vector.broadcast %295 : vector<16x1xf32> to vector<16x32xf32>
    %298 = vector.broadcast %296 : vector<1x32xf32> to vector<16x32xf32>
    %299 = arith.mulf %297, %298 : vector<16x32xf32>
    %300 = arith.addf %294, %299 : vector<16x32xf32>
    %301 = vector.extract_strided_slice %259 {offsets = [0, 7], sizes = [16, 1], strides = [1, 1]} : vector<16x8xf32> to vector<16x1xf32>
    %302 = vector.extract_strided_slice %4 {offsets = [7, 0], sizes = [1, 32], strides = [1, 1]} : vector<8x32xf32> to vector<1x32xf32>
    %303 = vector.broadcast %301 : vector<16x1xf32> to vector<16x32xf32>
    %304 = vector.broadcast %302 : vector<1x32xf32> to vector<16x32xf32>
    %305 = arith.mulf %303, %304 : vector<16x32xf32>
    %306 = arith.addf %300, %305 : vector<16x32xf32>
    %307 = vector.broadcast %8 : vector<1x32xf32> to vector<16x32xf32>
    %308 = arith.addf %306, %307 : vector<16x32xf32>
    %cst_15 = arith.constant 0.000000e+00 : f32
    %309 = vector.broadcast %cst_15 : f32 to vector<16x32xf32>
    %310 = arith.maximumf %308, %309 : vector<16x32xf32>
    %311 = vector.broadcast %9 : vector<1x32xf32> to vector<16x32xf32>
    %312 = arith.mulf %310, %311 : vector<16x32xf32>
    %cst_16 = arith.constant dense<0.000000e+00> : vector<16xf32>
    %313 = vector.multi_reduction <add>, %312, %cst_16 [1] : vector<16x32xf32> to vector<16xf32>
    %314 = vector.shape_cast %313 : vector<16xf32> to vector<16x1xf32>
    %315 = vector.broadcast %10 : vector<1x1xf32> to vector<16x1xf32>
    %316 = arith.addf %314, %315 : vector<16x1xf32>
    %c0_17 = arith.constant 0 : index
    %c0_18 = arith.constant 0 : index
    %317 = vector.load %arg4[%c0_17, %c0_18] : memref<16x8xf32, #tpu.memory_space<vmem>>, vector<16x8xf32>
    tpu.vector_store %arg4[%c0_17, %c0_18], %259 {strides = array<i32>} : memref<16x8xf32, #tpu.memory_space<vmem>>, vector<16x8xf32>,
    %c0_19 = arith.constant 0 : index
    %c0_20 = arith.constant 0 : index
    %318 = vector.load %arg5[%c0_19, %c0_20] : memref<16x1xf32, #tpu.memory_space<vmem>>, vector<16x1xf32>
    tpu.vector_store %arg5[%c0_19, %c0_20], %316 {strides = array<i32>} : memref<16x1xf32, #tpu.memory_space<vmem>>, vector<16x1xf32>,
    return
  }
  func.func @transform_0(%arg0: i32) -> (i32, i32) {
    %c0_i32 = arith.constant 0 : i32
    %c0_i32_0 = arith.constant 0 : i32
    return %arg0, %c0_i32 : i32, i32
  }
  func.func @transform_1(%arg0: i32) -> (i32, i32) {
    %c0_i32 = arith.constant 0 : i32
    %c0_i32_0 = arith.constant 0 : i32
    %c0_i32_1 = arith.constant 0 : i32
    return %c0_i32, %c0_i32_0 : i32, i32
  }
  func.func @transform_2(%arg0: i32) -> (i32, i32) {
    %c0_i32 = arith.constant 0 : i32
    %c0_i32_0 = arith.constant 0 : i32
    %c0_i32_1 = arith.constant 0 : i32
    return %c0_i32, %c0_i32_0 : i32, i32
  }
  func.func @transform_3(%arg0: i32) -> (i32, i32) {
    %c0_i32 = arith.constant 0 : i32
    %c0_i32_0 = arith.constant 0 : i32
    return %arg0, %c0_i32 : i32, i32
  }
  func.func @transform_4(%arg0: i32) -> (i32, i32) {
    %c0_i32 = arith.constant 0 : i32
    %c0_i32_0 = arith.constant 0 : i32
    return %arg0, %c0_i32 : i32, i32
  }
}

</mosaic_0001>

<llo_original>
// kernel: tpu_custom_call.1
$region0: #{tpu_custom_call.1}
  #allocation0 [shape = 'u32[]', space=smem, size = 0x4, offset = 0x4, fixed_abs, tag = 'smem constant byte address 0x4 - core index']
  #allocation1 [shape = 'u32[144,128]{1,0:T(1,128)}', space=vmem, size = 0x12000, scoped, tag = 'internal scratch']
  %s0 = inlined_call_operand.vmem [shape: f32[16,8], index: 0, kind: input, shape index: {}]
  %s1 = inlined_call_operand.vmem [shape: f32[80,32], index: 1, kind: input, shape index: {}]
  %s2 = inlined_call_operand.vmem [shape: f32[8,32], index: 2, kind: input, shape index: {}]
  %s3 = inlined_call_operand.vmem [shape: f32[16,8], index: 3, kind: output, shape index: {0}]
  %s4 = inlined_call_operand.vmem [shape: f32[16,1], index: 4, kind: output, shape index: {1}]
  %5 = xla_tuple %s3, %s4
  %s6 = sld [smem:[#allocation0]]
  $region30: #{tpu_custom_call.1} parent=0
    _
  %s8 = ssub.s32 1, %s6
  %s9 = scalar_select 0, %s8, %s6
  // Predicated region
  $region2: #{tpu_custom_call.1} parent=0 // pred_check
    _
  $region3: #{tpu_custom_call.1} parent=0 // pred_check_branch
    %11 = sbr.rel (0) target = $region5
  $region4: #{tpu_custom_call.1} parent=0 // pred_region
    _
  $region5: #{tpu_custom_call.1} parent=0 // pred_fallthru
    _
  // Predicated region
  $region6: #{tpu_custom_call.1} parent=0 // pred_check
    _
  $region7: #{tpu_custom_call.1} parent=0 // pred_check_branch
    %13 = sbr.rel (0) target = $region9
  $region8: #{tpu_custom_call.1} parent=0 // pred_region
    _
  $region9: #{tpu_custom_call.1} parent=0 // pred_fallthru
    _
  // Predicated region
  $region10: #{tpu_custom_call.1} parent=0 // pred_check
    _
  $region11: #{tpu_custom_call.1} parent=0 // pred_check_branch
    %15 = sbr.rel (0) target = $region13
  $region12: #{tpu_custom_call.1} parent=0 // pred_region
    _
  $region13: #{tpu_custom_call.1} parent=0 // pred_fallthru
    _
  %v16 = vld [vmem:[%s0] sm:$0xff]
  %v17 = vld [vmem:[%s0 + $0x8] sm:$0xff]
  %v18 = vld [vmem:[%s1] sm:$0xff]
  %v19 = vld [vmem:[%s1 + $0x8] sm:$0xff]
  %v20 = vld [vmem:[%s1 + $0x10] sm:$0xff]
  %v21 = vld [vmem:[%s1 + $0x18] sm:$0xff]
  %v22 = vld [vmem:[%s1 + $0x20] sm:$0xff]
  %v23 = vld [vmem:[%s1 + $0x28] sm:$0xff]
  %v24 = vld [vmem:[%s1 + $0x30] sm:$0xff]
  %v25 = vld [vmem:[%s1 + $0x38] sm:$0xff]
  %v26 = vld [vmem:[%s1 + $0x40] sm:$0xff]
  %v27 = vld [vmem:[%s1 + $0x48] sm:$0xff]
  %v28 = vld [vmem:[%s2] sm:$0x1]
  %v29 = vld [vmem:[%s2 + $0x1] sm:$0x1]
  %v30 = vld [vmem:[%s2 + $0x2] sm:$0x1]
  %v31 = vld [vmem:[%s2 + $0x3] sm:$0x1]
  %v32 = vld [vmem:[%s2 + $0x4] sm:$0x1]
  %v33 = vld [vmem:[%s2 + $0x5] sm:$0x1]
  %35 = vset.pattern.permute.xlu0 0
  %36 = vperm.xlu0 %35, %v16
  %v37 = vpop.permute.xlu0 %36
  %40 = vset.pattern.permute.xlu0 0
  %41 = vperm.xlu0 %40, %v17
  %v42 = vpop.permute.xlu0 %41
  %v44 = vlaneseq
  %v45 = vshrl.u32 %v44, 7
  %v46 = vsub.s32 0, %v45
  %v47 = vrot.slane %v18, %v46
  %v48 = vmul.f32 %v37, %v47
  %v49 = vmul.f32 %v42, %v47
  %50 = vset.pattern.permute.xlu0 1
  %51 = vperm.xlu0 %50, %v16
  %v52 = vpop.permute.xlu0 %51
  %54 = vset.pattern.permute.xlu0 1
  %55 = vperm.xlu0 %54, %v17
  %v56 = vpop.permute.xlu0 %55
  %v58 = vlaneseq
  %v59 = vshrl.u32 %v58, 7
  %v60 = vsub.s32 1, %v59
  %v61 = vrot.slane %v18, %v60
  %v62 = vmul.f32 %v52, %v61
  %v63 = vmul.f32 %v56, %v61
  %v64 = vadd.f32 %v48, %v62
  %v65 = vadd.f32 %v49, %v63
  %66 = vset.pattern.permute.xlu0 2
  %67 = vperm.xlu0 %66, %v16
  %v68 = vpop.permute.xlu0 %67
  %70 = vset.pattern.permute.xlu0 2
  %71 = vperm.xlu0 %70, %v17
  %v72 = vpop.permute.xlu0 %71
  %v74 = vlaneseq
  %v75 = vshrl.u32 %v74, 7
  %v76 = vsub.s32 2, %v75
  %v77 = vrot.slane %v18, %v76
  %v78 = vmul.f32 %v68, %v77
  %v79 = vmul.f32 %v72, %v77
  %v80 = vadd.f32 %v64, %v78
  %v81 = vadd.f32 %v65, %v79
  %82 = vset.pattern.permute.xlu0 3
  %83 = vperm.xlu0 %82, %v16
  %v84 = vpop.permute.xlu0 %83
  %86 = vset.pattern.permute.xlu0 3
  %87 = vperm.xlu0 %86, %v17
  %v88 = vpop.permute.xlu0 %87
  %v90 = vlaneseq
  %v91 = vshrl.u32 %v90, 7
  %v92 = vsub.s32 3, %v91
  %v93 = vrot.slane %v18, %v92
  %v94 = vmul.f32 %v84, %v93
  %v95 = vmul.f32 %v88, %v93
  %v96 = vadd.f32 %v80, %v94
  %v97 = vadd.f32 %v81, %v95
  %98 = vset.pattern.permute.xlu0 4
  %99 = vperm.xlu0 %98, %v16
  %v100 = vpop.permute.xlu0 %99
  %102 = vset.pattern.permute.xlu0 4
  %103 = vperm.xlu0 %102, %v17
  %v104 = vpop.permute.xlu0 %103
  %v106 = vlaneseq
  %v107 = vshrl.u32 %v106, 7
  %v108 = vsub.s32 4, %v107
  %v109 = vrot.slane %v18, %v108
  %v110 = vmul.f32 %v100, %v109
  %v111 = vmul.f32 %v104, %v109
  %v112 = vadd.f32 %v96, %v110
  %v113 = vadd.f32 %v97, %v111
  %114 = vset.pattern.permute.xlu0 5
  %115 = vperm.xlu0 %114, %v16
  %v116 = vpop.permute.xlu0 %115
  %118 = vset.pattern.permute.xlu0 5
  %119 = vperm.xlu0 %118, %v17
  %v120 = vpop.permute.xlu0 %119
  %v122 = vlaneseq
  %v123 = vshrl.u32 %v122, 7
  %v124 = vsub.s32 5, %v123
  %v125 = vrot.slane %v18, %v124
  %v126 = vmul.f32 %v116, %v125
  %v127 = vmul.f32 %v120, %v125
  %v128 = vadd.f32 %v112, %v126
  %v129 = vadd.f32 %v113, %v127
  %130 = vset.pattern.permute.xlu0 6
  %131 = vperm.xlu0 %130, %v16
  %v132 = vpop.permute.xlu0 %131
  %134 = vset.pattern.permute.xlu0 6
  %135 = vperm.xlu0 %134, %v17
  %v136 = vpop.permute.xlu0 %135
  %v138 = vlaneseq
  %v139 = vshrl.u32 %v138, 7
  %v140 = vsub.s32 6, %v139
  %v141 = vrot.slane %v18, %v140
  %v142 = vmul.f32 %v132, %v141
  %v143 = vmul.f32 %v136, %v141
  %v144 = vadd.f32 %v128, %v142
  %v145 = vadd.f32 %v129, %v143
  %146 = vset.pattern.permute.xlu0 7
  %147 = vperm.xlu0 %146, %v16
  %v148 = vpop.permute.xlu0 %147
  %150 = vset.pattern.permute.xlu0 7
  %151 = vperm.xlu0 %150, %v17
  %v152 = vpop.permute.xlu0 %151
  %v154 = vlaneseq
  %v155 = vshrl.u32 %v154, 7
  %v156 = vsub.s32 7, %v155
  %v157 = vrot.slane %v18, %v156
  %v158 = vmul.f32 %v148, %v157
  %v159 = vmul.f32 %v152, %v157
  %v160 = vadd.f32 %v144, %v158
  %v161 = vadd.f32 %v145, %v159
  %v162 = vlaneseq
  %v163 = vshrl.u32 %v162, 7
  %v164 = vsub.s32 0, %v163
  %v165 = vrot.slane %v28, %v164
  %v166 = vadd.f32 %v160, %v165
  %v167 = vadd.f32 %v161, %v165
  %v168 = vmax.f32 %v166, 0.0
  %v169 = vmax.f32 %v167, 0.0
  %v170 = vlaneseq
  %v171 = vshrl.u32 %v170, 7
  %v172 = vsub.s32 0, %v171
  %v173 = vrot.slane %v29, %v172
  %vm174 = vcmask 261120
  %v176 = vsel %vm174, %v168, 0
  %v179 = vsel %vm174, %v169, 0
  %181 = vmatprep.subr.mxu0 0.0
  %182 = vmatpush1.msra.mxu0 %v19
  %183 = vmatprep.subr.mxu0 0.0
  %184 = vmatpush1.msra.mxu0 %v20
  %185 = vmatprep.subr.mxu0 0.0
  %186 = vmatpush1.msra.mxu0 %v21
  %187 = vmatprep.subr.mxu0 0.0
  %188 = vmatpush1.msra.mxu0 %v22
  %189 = vmatprep.subr.mxu0 0.0
  %190 = vmatpush1.msra.mxu0 0.0
  %191 = vmatprep.subr.mxu0 0.0
  %192 = vmatpush1.msra.mxu0 0.0
  %193 = vmatprep.subr.mxu0 0.0
  %194 = vmatpush1.msra.mxu0 0.0
  %195 = vmatprep.subr.mxu0 0.0
  %196 = vmatpush1.msra.mxu0 0.0
  %197 = vmatprep.subr.mxu0 0.0
  %198 = vmatpush1.msra.mxu0 0.0
  %199 = vmatprep.subr.mxu0 0.0
  %200 = vmatpush1.msra.mxu0 0.0
  %201 = vmatprep.subr.mxu0 0.0
  %202 = vmatpush1.msra.mxu0 0.0
  %203 = vmatprep.subr.mxu0 0.0
  %204 = vmatpush1.msra.mxu0 0.0
  %205 = vmatprep.subr.mxu0 0.0
  %206 = vmatpush1.msra.mxu0 0.0
  %207 = vmatprep.subr.mxu0 0.0
  %208 = vmatpush1.msra.mxu0 0.0
  %209 = vmatprep.subr.mxu0 0.0
  %210 = vmatpush1.msra.mxu0 0.0
  %211 = vmatprep.subr.mxu0 0.0
  %212 = vmatpush1.msra.mxu0 0.0
  %213 = vmatprep.subr.mxu0 0.0
  %214 = vmatpush1.msra.mxu0 0.0
  %215 = vmatprep.subr.mxu0 0.0
  %216 = vmatpush1.msra.mxu0 0.0
  %217 = vmatprep.subr.mxu0 0.0
  %218 = vmatpush1.msra.mxu0 0.0
  %219 = vmatprep.subr.mxu0 0.0
  %220 = vmatpush1.msra.mxu0 0.0
  %221 = vmatprep.subr.mxu0 0.0
  %222 = vmatpush1.msra.mxu0 0.0
  %223 = vmatprep.subr.mxu0 0.0
  %224 = vmatpush1.msra.mxu0 0.0
  %225 = vmatprep.subr.mxu0 0.0
  %226 = vmatpush1.msra.mxu0 0.0
  %227 = vmatprep.subr.mxu0 0.0
  %228 = vmatpush1.msra.mxu0 0.0
  %229 = vmatprep.subr.mxu0 0.0
  %230 = vmatpush1.msra.mxu0 0.0
  %231 = vmatprep.subr.mxu0 0.0
  %232 = vmatpush1.msra.mxu0 0.0
  %233 = vmatprep.subr.mxu0 0.0
  %234 = vmatpush1.msra.mxu0 0.0
  %235 = vmatprep.subr.mxu0 0.0
  %236 = vmatpush1.msra.mxu0 0.0
  %237 = vmatprep.subr.mxu0 0.0
  %238 = vmatpush1.msra.mxu0 0.0
  %239 = vmatprep.subr.mxu0 0.0
  %240 = vmatpush1.msra.mxu0 0.0
  %241 = vmatprep.subr.mxu0 0.0
  %242 = vmatpush1.msra.mxu0 0.0
  %243 = vmatprep.subr.mxu0 0.0
  %244 = vmatpush1.msra.mxu0 0.0
  %245 = vmatprep.mubr.f32.mxu0 0.0
  %246 = vmatmul.mubr.f32.gmra.mrb[0].mxu0 %v176
  %v247 = vpop.f32.mrb[0].mxu0
  %v248 = vadd.f32 %v173, %v247
  %v249 = vpop.f32.mrb[0].mxu0
  %250 = vmatprep.mubr.f32.mxu0 0.0
  %251 = vmatmul.mubr.f32.gmra.mrb[0].mxu0 %v179
  %v252 = vpop.f32.mrb[0].mxu0
  %v253 = vadd.f32 %v173, %v252
  %v254 = vpop.f32.mrb[0].mxu0
  %255 = vdwg.mxu0
  %v256 = vmax.f32 %v248, 0.0
  %v257 = vmax.f32 %v253, 0.0
  %259 = vset.pattern.permute.xlu0 0
  %260 = vperm.xlu0 %259, %v256
  %v261 = vpop.permute.xlu0 %260
  %264 = vset.pattern.permute.xlu0 0
  %265 = vperm.xlu0 %264, %v257
  %v266 = vpop.permute.xlu0 %265
  %v268 = vlaneseq
  %v269 = vshrl.u32 %v268, 7
  %v270 = vsub.s32 0, %v269
  %v271 = vrot.slane %v23, %v270
  %v272 = vmul.f32 %v261, %v271
  %v273 = vmul.f32 %v266, %v271
  %274 = vset.pattern.permute.xlu0 1
  %275 = vperm.xlu0 %274, %v256
  %v276 = vpop.permute.xlu0 %275
  %278 = vset.pattern.permute.xlu0 1
  %279 = vperm.xlu0 %278, %v257
  %v280 = vpop.permute.xlu0 %279
  %v282 = vlaneseq
  %v283 = vshrl.u32 %v282, 7
  %v284 = vsub.s32 1, %v283
  %v285 = vrot.slane %v23, %v284
  %v286 = vmul.f32 %v276, %v285
  %v287 = vmul.f32 %v280, %v285
  %v288 = vadd.f32 %v272, %v286
  %v289 = vadd.f32 %v273, %v287
  %290 = vset.pattern.permute.xlu0 2
  %291 = vperm.xlu0 %290, %v256
  %v292 = vpop.permute.xlu0 %291
  %294 = vset.pattern.permute.xlu0 2
  %295 = vperm.xlu0 %294, %v257
  %v296 = vpop.permute.xlu0 %295
  %v298 = vlaneseq
  %v299 = vshrl.u32 %v298, 7
  %v300 = vsub.s32 2, %v299
  %v301 = vrot.slane %v23, %v300
  %v302 = vmul.f32 %v292, %v301
  %v303 = vmul.f32 %v296, %v301
  %v304 = vadd.f32 %v288, %v302
  %v305 = vadd.f32 %v289, %v303
  %306 = vset.pattern.permute.xlu0 3
  %307 = vperm.xlu0 %306, %v256
  %v308 = vpop.permute.xlu0 %307
  %310 = vset.pattern.permute.xlu0 3
  %311 = vperm.xlu0 %310, %v257
  %v312 = vpop.permute.xlu0 %311
  %v314 = vlaneseq
  %v315 = vshrl.u32 %v314, 7
  %v316 = vsub.s32 3, %v315
  %v317 = vrot.slane %v23, %v316
  %v318 = vmul.f32 %v308, %v317
  %v319 = vmul.f32 %v312, %v317
  %v320 = vadd.f32 %v304, %v318
  %v321 = vadd.f32 %v305, %v319
  %322 = vset.pattern.permute.xlu0 4
  %323 = vperm.xlu0 %322, %v256
  %v324 = vpop.permute.xlu0 %323
  %326 = vset.pattern.permute.xlu0 4
  %327 = vperm.xlu0 %326, %v257
  %v328 = vpop.permute.xlu0 %327
  %v330 = vlaneseq
  %v331 = vshrl.u32 %v330, 7
  %v332 = vsub.s32 4, %v331
  %v333 = vrot.slane %v23, %v332
  %v334 = vmul.f32 %v324, %v333
  %v335 = vmul.f32 %v328, %v333
  %v336 = vadd.f32 %v320, %v334
  %v337 = vadd.f32 %v321, %v335
  %338 = vset.pattern.permute.xlu0 5
  %339 = vperm.xlu0 %338, %v256
  %v340 = vpop.permute.xlu0 %339
  %342 = vset.pattern.permute.xlu0 5
  %343 = vperm.xlu0 %342, %v257
  %v344 = vpop.permute.xlu0 %343
  %v346 = vlaneseq
  %v347 = vshrl.u32 %v346, 7
  %v348 = vsub.s32 5, %v347
  %v349 = vrot.slane %v23, %v348
  %v350 = vmul.f32 %v340, %v349
  %v351 = vmul.f32 %v344, %v349
  %v352 = vadd.f32 %v336, %v350
  %v353 = vadd.f32 %v337, %v351
  %354 = vset.pattern.permute.xlu0 6
  %355 = vperm.xlu0 %354, %v256
  %v356 = vpop.permute.xlu0 %355
  %358 = vset.pattern.permute.xlu0 6
  %359 = vperm.xlu0 %358, %v257
  %v360 = vpop.permute.xlu0 %359
  %v362 = vlaneseq
  %v363 = vshrl.u32 %v362, 7
  %v364 = vsub.s32 6, %v363
  %v365 = vrot.slane %v23, %v364
  %v366 = vmul.f32 %v356, %v365
  %v367 = vmul.f32 %v360, %v365
  %v368 = vadd.f32 %v352, %v366
  %v369 = vadd.f32 %v353, %v367
  %370 = vset.pattern.permute.xlu0 7
  %371 = vperm.xlu0 %370, %v256
  %v372 = vpop.permute.xlu0 %371
  %374 = vset.pattern.permute.xlu0 7
  %375 = vperm.xlu0 %374, %v257
  %v376 = vpop.permute.xlu0 %375
  %v378 = vlaneseq
  %v379 = vshrl.u32 %v378, 7
  %v380 = vsub.s32 7, %v379
  %v381 = vrot.slane %v23, %v380
  %v382 = vmul.f32 %v372, %v381
  %v383 = vmul.f32 %v376, %v381
  %v384 = vadd.f32 %v368, %v382
  %v385 = vadd.f32 %v369, %v383
  %386 = vset.pattern.permute.xlu0 8
  %387 = vperm.xlu0 %386, %v256
  %v388 = vpop.permute.xlu0 %387
  %390 = vset.pattern.permute.xlu0 8
  %391 = vperm.xlu0 %390, %v257
  %v392 = vpop.permute.xlu0 %391
  %v394 = vlaneseq
  %v395 = vshrl.u32 %v394, 7
  %v396 = vsub.s32 0, %v395
  %v397 = vrot.slane %v24, %v396
  %v398 = vmul.f32 %v388, %v397
  %v399 = vmul.f32 %v392, %v397
  %v400 = vadd.f32 %v384, %v398
  %v401 = vadd.f32 %v385, %v399
  %402 = vset.pattern.permute.xlu0 9
  %403 = vperm.xlu0 %402, %v256
  %v404 = vpop.permute.xlu0 %403
  %406 = vset.pattern.permute.xlu0 9
  %407 = vperm.xlu0 %406, %v257
  %v408 = vpop.permute.xlu0 %407
  %v410 = vlaneseq
  %v411 = vshrl.u32 %v410, 7
  %v412 = vsub.s32 1, %v411
  %v413 = vrot.slane %v24, %v412
  %v414 = vmul.f32 %v404, %v413
  %v415 = vmul.f32 %v408, %v413
  %v416 = vadd.f32 %v400, %v414
  %v417 = vadd.f32 %v401, %v415
  %418 = vset.pattern.permute.xlu0 10
  %419 = vperm.xlu0 %418, %v256
  %v420 = vpop.permute.xlu0 %419
  %422 = vset.pattern.permute.xlu0 10
  %423 = vperm.xlu0 %422, %v257
  %v424 = vpop.permute.xlu0 %423
  %v426 = vlaneseq
  %v427 = vshrl.u32 %v426, 7
  %v428 = vsub.s32 2, %v427
  %v429 = vrot.slane %v24, %v428
  %v430 = vmul.f32 %v420, %v429
  %v431 = vmul.f32 %v424, %v429
  %v432 = vadd.f32 %v416, %v430
  %v433 = vadd.f32 %v417, %v431
  %434 = vset.pattern.permute.xlu0 11
  %435 = vperm.xlu0 %434, %v256
  %v436 = vpop.permute.xlu0 %435
  %438 = vset.pattern.permute.xlu0 11
  %439 = vperm.xlu0 %438, %v257
  %v440 = vpop.permute.xlu0 %439
  %v442 = vlaneseq
  %v443 = vshrl.u32 %v442, 7
  %v444 = vsub.s32 3, %v443
  %v445 = vrot.slane %v24, %v444
  %v446 = vmul.f32 %v436, %v445
  %v447 = vmul.f32 %v440, %v445
  %v448 = vadd.f32 %v432, %v446
  %v449 = vadd.f32 %v433, %v447
  %450 = vset.pattern.permute.xlu0 12
  %451 = vperm.xlu0 %450, %v256
  %v452 = vpop.permute.xlu0 %451
  %454 = vset.pattern.permute.xlu0 12
  %455 = vperm.xlu0 %454, %v257
  %v456 = vpop.permute.xlu0 %455
  %v458 = vlaneseq
  %v459 = vshrl.u32 %v458, 7
  %v460 = vsub.s32 4, %v459
  %v461 = vrot.slane %v24, %v460
  %v462 = vmul.f32 %v452, %v461
  %v463 = vmul.f32 %v456, %v461
  %v464 = vadd.f32 %v448, %v462
  %v465 = vadd.f32 %v449, %v463
  %466 = vset.pattern.permute.xlu0 13
  %467 = vperm.xlu0 %466, %v256
  %v468 = vpop.permute.xlu0 %467
  %470 = vset.pattern.permute.xlu0 13
  %471 = vperm.xlu0 %470, %v257
  %v472 = vpop.permute.xlu0 %471
  %v474 = vlaneseq
  %v475 = vshrl.u32 %v474, 7
  %v476 = vsub.s32 5, %v475
  %v477 = vrot.slane %v24, %v476
  %v478 = vmul.f32 %v468, %v477
  %v479 = vmul.f32 %v472, %v477
  %v480 = vadd.f32 %v464, %v478
  %v481 = vadd.f32 %v465, %v479
  %482 = vset.pattern.permute.xlu0 14
  %483 = vperm.xlu0 %482, %v256
  %v484 = vpop.permute.xlu0 %483
  %486 = vset.pattern.permute.xlu0 14
  %487 = vperm.xlu0 %486, %v257
  %v488 = vpop.permute.xlu0 %487
  %v490 = vlaneseq
  %v491 = vshrl.u32 %v490, 7
  %v492 = vsub.s32 6, %v491
  %v493 = vrot.slane %v24, %v492
  %v494 = vmul.f32 %v484, %v493
  %v495 = vmul.f32 %v488, %v493
  %v496 = vadd.f32 %v480, %v494
  %v497 = vadd.f32 %v481, %v495
  %498 = vset.pattern.permute.xlu0 15
  %499 = vperm.xlu0 %498, %v256
  %v500 = vpop.permute.xlu0 %499
  %502 = vset.pattern.permute.xlu0 15
  %503 = vperm.xlu0 %502, %v257
  %v504 = vpop.permute.xlu0 %503
  %v506 = vlaneseq
  %v507 = vshrl.u32 %v506, 7
  %v508 = vsub.s32 7, %v507
  %v509 = vrot.slane %v24, %v508
  %v510 = vmul.f32 %v500, %v509
  %v511 = vmul.f32 %v504, %v509
  %v512 = vadd.f32 %v496, %v510
  %v513 = vadd.f32 %v497, %v511
  %514 = vset.pattern.permute.xlu0 16
  %515 = vperm.xlu0 %514, %v256
  %v516 = vpop.permute.xlu0 %515
  %518 = vset.pattern.permute.xlu0 16
  %519 = vperm.xlu0 %518, %v257
  %v520 = vpop.permute.xlu0 %519
  %v522 = vlaneseq
  %v523 = vshrl.u32 %v522, 7
  %v524 = vsub.s32 0, %v523
  %v525 = vrot.slane %v25, %v524
  %v526 = vmul.f32 %v516, %v525
  %v527 = vmul.f32 %v520, %v525
  %v528 = vadd.f32 %v512, %v526
  %v529 = vadd.f32 %v513, %v527
  %530 = vset.pattern.permute.xlu0 17
  %531 = vperm.xlu0 %530, %v256
  %v532 = vpop.permute.xlu0 %531
  %534 = vset.pattern.permute.xlu0 17
  %535 = vperm.xlu0 %534, %v257
  %v536 = vpop.permute.xlu0 %535
  %v538 = vlaneseq
  %v539 = vshrl.u32 %v538, 7
  %v540 = vsub.s32 1, %v539
  %v541 = vrot.slane %v25, %v540
  %v542 = vmul.f32 %v532, %v541
  %v543 = vmul.f32 %v536, %v541
  %v544 = vadd.f32 %v528, %v542
  %v545 = vadd.f32 %v529, %v543
  %546 = vset.pattern.permute.xlu0 18
  %547 = vperm.xlu0 %546, %v256
  %v548 = vpop.permute.xlu0 %547
  %550 = vset.pattern.permute.xlu0 18
  %551 = vperm.xlu0 %550, %v257
  %v552 = vpop.permute.xlu0 %551
  %v554 = vlaneseq
  %v555 = vshrl.u32 %v554, 7
  %v556 = vsub.s32 2, %v555
  %v557 = vrot.slane %v25, %v556
  %v558 = vmul.f32 %v548, %v557
  %v559 = vmul.f32 %v552, %v557
  %v560 = vadd.f32 %v544, %v558
  %v561 = vadd.f32 %v545, %v559
  %562 = vset.pattern.permute.xlu0 19
  %563 = vperm.xlu0 %562, %v256
  %v564 = vpop.permute.xlu0 %563
  %566 = vset.pattern.permute.xlu0 19
  %567 = vperm.xlu0 %566, %v257
  %v568 = vpop.permute.xlu0 %567
  %v570 = vlaneseq
  %v571 = vshrl.u32 %v570, 7
  %v572 = vsub.s32 3, %v571
  %v573 = vrot.slane %v25, %v572
  %v574 = vmul.f32 %v564, %v573
  %v575 = vmul.f32 %v568, %v573
  %v576 = vadd.f32 %v560, %v574
  %v577 = vadd.f32 %v561, %v575
  %578 = vset.pattern.permute.xlu0 20
  %579 = vperm.xlu0 %578, %v256
  %v580 = vpop.permute.xlu0 %579
  %582 = vset.pattern.permute.xlu0 20
  %583 = vperm.xlu0 %582, %v257
  %v584 = vpop.permute.xlu0 %583
  %v586 = vlaneseq
  %v587 = vshrl.u32 %v586, 7
  %v588 = vsub.s32 4, %v587
  %v589 = vrot.slane %v25, %v588
  %v590 = vmul.f32 %v580, %v589
  %v591 = vmul.f32 %v584, %v589
  %v592 = vadd.f32 %v576, %v590
  %v593 = vadd.f32 %v577, %v591
  %594 = vset.pattern.permute.xlu0 21
  %595 = vperm.xlu0 %594, %v256
  %v596 = vpop.permute.xlu0 %595
  %598 = vset.pattern.permute.xlu0 21
  %599 = vperm.xlu0 %598, %v257
  %v600 = vpop.permute.xlu0 %599
  %v602 = vlaneseq
  %v603 = vshrl.u32 %v602, 7
  %v604 = vsub.s32 5, %v603
  %v605 = vrot.slane %v25, %v604
  %v606 = vmul.f32 %v596, %v605
  %v607 = vmul.f32 %v600, %v605
  %v608 = vadd.f32 %v592, %v606
  %v609 = vadd.f32 %v593, %v607
  %610 = vset.pattern.permute.xlu0 22
  %611 = vperm.xlu0 %610, %v256
  %v612 = vpop.permute.xlu0 %611
  %614 = vset.pattern.permute.xlu0 22
  %615 = vperm.xlu0 %614, %v257
  %v616 = vpop.permute.xlu0 %615
  %v618 = vlaneseq
  %v619 = vshrl.u32 %v618, 7
  %v620 = vsub.s32 6, %v619
  %v621 = vrot.slane %v25, %v620
  %v622 = vmul.f32 %v612, %v621
  %v623 = vmul.f32 %v616, %v621
  %v624 = vadd.f32 %v608, %v622
  %v625 = vadd.f32 %v609, %v623
  %626 = vset.pattern.permute.xlu0 23
  %627 = vperm.xlu0 %626, %v256
  %v628 = vpop.permute.xlu0 %627
  %630 = vset.pattern.permute.xlu0 23
  %631 = vperm.xlu0 %630, %v257
  %v632 = vpop.permute.xlu0 %631
  %v634 = vlaneseq
  %v635 = vshrl.u32 %v634, 7
  %v636 = vsub.s32 7, %v635
  %v637 = vrot.slane %v25, %v636
  %v638 = vmul.f32 %v628, %v637
  %v639 = vmul.f32 %v632, %v637
  %v640 = vadd.f32 %v624, %v638
  %v641 = vadd.f32 %v625, %v639
  %642 = vset.pattern.permute.xlu0 24
  %643 = vperm.xlu0 %642, %v256
  %v644 = vpop.permute.xlu0 %643
  %646 = vset.pattern.permute.xlu0 24
  %647 = vperm.xlu0 %646, %v257
  %v648 = vpop.permute.xlu0 %647
  %v650 = vlaneseq
  %v651 = vshrl.u32 %v650, 7
  %v652 = vsub.s32 0, %v651
  %v653 = vrot.slane %v26, %v652
  %v654 = vmul.f32 %v644, %v653
  %v655 = vmul.f32 %v648, %v653
  %v656 = vadd.f32 %v640, %v654
  %v657 = vadd.f32 %v641, %v655
  %658 = vset.pattern.permute.xlu0 25
  %659 = vperm.xlu0 %658, %v256
  %v660 = vpop.permute.xlu0 %659
  %662 = vset.pattern.permute.xlu0 25
  %663 = vperm.xlu0 %662, %v257
  %v664 = vpop.permute.xlu0 %663
  %v666 = vlaneseq
  %v667 = vshrl.u32 %v666, 7
  %v668 = vsub.s32 1, %v667
  %v669 = vrot.slane %v26, %v668
  %v670 = vmul.f32 %v660, %v669
  %v671 = vmul.f32 %v664, %v669
  %v672 = vadd.f32 %v656, %v670
  %v673 = vadd.f32 %v657, %v671
  %674 = vset.pattern.permute.xlu0 26
  %675 = vperm.xlu0 %674, %v256
  %v676 = vpop.permute.xlu0 %675
  %678 = vset.pattern.permute.xlu0 26
  %679 = vperm.xlu0 %678, %v257
  %v680 = vpop.permute.xlu0 %679
  %v682 = vlaneseq
  %v683 = vshrl.u32 %v682, 7
  %v684 = vsub.s32 2, %v683
  %v685 = vrot.slane %v26, %v684
  %v686 = vmul.f32 %v676, %v685
  %v687 = vmul.f32 %v680, %v685
  %v688 = vadd.f32 %v672, %v686
  %v689 = vadd.f32 %v673, %v687
  %690 = vset.pattern.permute.xlu0 27
  %691 = vperm.xlu0 %690, %v256
  %v692 = vpop.permute.xlu0 %691
  %694 = vset.pattern.permute.xlu0 27
  %695 = vperm.xlu0 %694, %v257
  %v696 = vpop.permute.xlu0 %695
  %v698 = vlaneseq
  %v699 = vshrl.u32 %v698, 7
  %v700 = vsub.s32 3, %v699
  %v701 = vrot.slane %v26, %v700
  %v702 = vmul.f32 %v692, %v701
  %v703 = vmul.f32 %v696, %v701
  %v704 = vadd.f32 %v688, %v702
  %v705 = vadd.f32 %v689, %v703
  %706 = vset.pattern.permute.xlu0 28
  %707 = vperm.xlu0 %706, %v256
  %v708 = vpop.permute.xlu0 %707
  %710 = vset.pattern.permute.xlu0 28
  %711 = vperm.xlu0 %710, %v257
  %v712 = vpop.permute.xlu0 %711
  %v714 = vlaneseq
  %v715 = vshrl.u32 %v714, 7
  %v716 = vsub.s32 4, %v715
  %v717 = vrot.slane %v26, %v716
  %v718 = vmul.f32 %v708, %v717
  %v719 = vmul.f32 %v712, %v717
  %v720 = vadd.f32 %v704, %v718
  %v721 = vadd.f32 %v705, %v719
  %722 = vset.pattern.permute.xlu0 29
  %723 = vperm.xlu0 %722, %v256
  %v724 = vpop.permute.xlu0 %723
  %726 = vset.pattern.permute.xlu0 29
  %727 = vperm.xlu0 %726, %v257
  %v728 = vpop.permute.xlu0 %727
  %v730 = vlaneseq
  %v731 = vshrl.u32 %v730, 7
  %v732 = vsub.s32 5, %v731
  %v733 = vrot.slane %v26, %v732
  %v734 = vmul.f32 %v724, %v733
  %v735 = vmul.f32 %v728, %v733
  %v736 = vadd.f32 %v720, %v734
  %v737 = vadd.f32 %v721, %v735
  %738 = vset.pattern.permute.xlu0 30
  %739 = vperm.xlu0 %738, %v256
  %v740 = vpop.permute.xlu0 %739
  %742 = vset.pattern.permute.xlu0 30
  %743 = vperm.xlu0 %742, %v257
  %v744 = vpop.permute.xlu0 %743
  %v746 = vlaneseq
  %v747 = vshrl.u32 %v746, 7
  %v748 = vsub.s32 6, %v747
  %v749 = vrot.slane %v26, %v748
  %v750 = vmul.f32 %v740, %v749
  %v751 = vmul.f32 %v744, %v749
  %v752 = vadd.f32 %v736, %v750
  %v753 = vadd.f32 %v737, %v751
  %754 = vset.pattern.permute.xlu0 31
  %755 = vperm.xlu0 %754, %v256
  %v756 = vpop.permute.xlu0 %755
  %758 = vset.pattern.permute.xlu0 31
  %759 = vperm.xlu0 %758, %v257
  %v760 = vpop.permute.xlu0 %759
  %v762 = vlaneseq
  %v763 = vshrl.u32 %v762, 7
  %v764 = vsub.s32 7, %v763
  %v765 = vrot.slane %v26, %v764
  %v766 = vmul.f32 %v756, %v765
  %v767 = vmul.f32 %v760, %v765
  %v768 = vadd.f32 %v752, %v766
  %v769 = vadd.f32 %v753, %v767
  %v770 = vlaneseq
  %v771 = vshrl.u32 %v770, 7
  %v772 = vsub.s32 0, %v771
  %v773 = vrot.slane %v30, %v772
  %v774 = vadd.f32 %v768, %v773
  %v775 = vadd.f32 %v769, %v773
  %777 = vset.pattern.permute.xlu0 0
  %778 = vperm.xlu0 %777, %v774
  %v779 = vpop.permute.xlu0 %778
  %782 = vset.pattern.permute.xlu0 0
  %783 = vperm.xlu0 %782, %v775
  %v784 = vpop.permute.xlu0 %783
  %v786 = vlaneseq
  %v787 = vshrl.u32 %v786, 7
  %v788 = vsub.s32 0, %v787
  %v789 = vrot.slane %v27, %v788
  %v790 = vmul.f32 %v779, %v789
  %v791 = vmul.f32 %v784, %v789
  %792 = vset.pattern.permute.xlu0 1
  %793 = vperm.xlu0 %792, %v774
  %v794 = vpop.permute.xlu0 %793
  %796 = vset.pattern.permute.xlu0 1
  %797 = vperm.xlu0 %796, %v775
  %v798 = vpop.permute.xlu0 %797
  %v800 = vlaneseq
  %v801 = vshrl.u32 %v800, 7
  %v802 = vsub.s32 1, %v801
  %v803 = vrot.slane %v27, %v802
  %v804 = vmul.f32 %v794, %v803
  %v805 = vmul.f32 %v798, %v803
  %v806 = vadd.f32 %v790, %v804
  %v807 = vadd.f32 %v791, %v805
  %808 = vset.pattern.permute.xlu0 2
  %809 = vperm.xlu0 %808, %v774
  %v810 = vpop.permute.xlu0 %809
  %812 = vset.pattern.permute.xlu0 2
  %813 = vperm.xlu0 %812, %v775
  %v814 = vpop.permute.xlu0 %813
  %v816 = vlaneseq
  %v817 = vshrl.u32 %v816, 7
  %v818 = vsub.s32 2, %v817
  %v819 = vrot.slane %v27, %v818
  %v820 = vmul.f32 %v810, %v819
  %v821 = vmul.f32 %v814, %v819
  %v822 = vadd.f32 %v806, %v820
  %v823 = vadd.f32 %v807, %v821
  %824 = vset.pattern.permute.xlu0 3
  %825 = vperm.xlu0 %824, %v774
  %v826 = vpop.permute.xlu0 %825
  %828 = vset.pattern.permute.xlu0 3
  %829 = vperm.xlu0 %828, %v775
  %v830 = vpop.permute.xlu0 %829
  %v832 = vlaneseq
  %v833 = vshrl.u32 %v832, 7
  %v834 = vsub.s32 3, %v833
  %v835 = vrot.slane %v27, %v834
  %v836 = vmul.f32 %v826, %v835
  %v837 = vmul.f32 %v830, %v835
  %v838 = vadd.f32 %v822, %v836
  %v839 = vadd.f32 %v823, %v837
  %840 = vset.pattern.permute.xlu0 4
  %841 = vperm.xlu0 %840, %v774
  %v842 = vpop.permute.xlu0 %841
  %844 = vset.pattern.permute.xlu0 4
  %845 = vperm.xlu0 %844, %v775
  %v846 = vpop.permute.xlu0 %845
  %v848 = vlaneseq
  %v849 = vshrl.u32 %v848, 7
  %v850 = vsub.s32 4, %v849
  %v851 = vrot.slane %v27, %v850
  %v852 = vmul.f32 %v842, %v851
  %v853 = vmul.f32 %v846, %v851
  %v854 = vadd.f32 %v838, %v852
  %v855 = vadd.f32 %v839, %v853
  %856 = vset.pattern.permute.xlu0 5
  %857 = vperm.xlu0 %856, %v774
  %v858 = vpop.permute.xlu0 %857
  %860 = vset.pattern.permute.xlu0 5
  %861 = vperm.xlu0 %860, %v775
  %v862 = vpop.permute.xlu0 %861
  %v864 = vlaneseq
  %v865 = vshrl.u32 %v864, 7
  %v866 = vsub.s32 5, %v865
  %v867 = vrot.slane %v27, %v866
  %v868 = vmul.f32 %v858, %v867
  %v869 = vmul.f32 %v862, %v867
  %v870 = vadd.f32 %v854, %v868
  %v871 = vadd.f32 %v855, %v869
  %872 = vset.pattern.permute.xlu0 6
  %873 = vperm.xlu0 %872, %v774
  %v874 = vpop.permute.xlu0 %873
  %876 = vset.pattern.permute.xlu0 6
  %877 = vperm.xlu0 %876, %v775
  %v878 = vpop.permute.xlu0 %877
  %v880 = vlaneseq
  %v881 = vshrl.u32 %v880, 7
  %v882 = vsub.s32 6, %v881
  %v883 = vrot.slane %v27, %v882
  %v884 = vmul.f32 %v874, %v883
  %v885 = vmul.f32 %v878, %v883
  %v886 = vadd.f32 %v870, %v884
  %v887 = vadd.f32 %v871, %v885
  %888 = vset.pattern.permute.xlu0 7
  %889 = vperm.xlu0 %888, %v774
  %v890 = vpop.permute.xlu0 %889
  %892 = vset.pattern.permute.xlu0 7
  %893 = vperm.xlu0 %892, %v775
  %v894 = vpop.permute.xlu0 %893
  %v896 = vlaneseq
  %v897 = vshrl.u32 %v896, 7
  %v898 = vsub.s32 7, %v897
  %v899 = vrot.slane %v27, %v898
  %v900 = vmul.f32 %v890, %v899
  %v901 = vmul.f32 %v894, %v899
  %v902 = vadd.f32 %v886, %v900
  %v903 = vadd.f32 %v887, %v901
  %v904 = vlaneseq
  %v905 = vshrl.u32 %v904, 7
  %v906 = vsub.s32 0, %v905
  %v907 = vrot.slane %v31, %v906
  %v908 = vadd.f32 %v902, %v907
  %v909 = vadd.f32 %v903, %v907
  %v910 = vmax.f32 %v908, 0.0
  %v911 = vmax.f32 %v909, 0.0
  %v912 = vlaneseq
  %v913 = vshrl.u32 %v912, 7
  %v914 = vsub.s32 0, %v913
  %v915 = vrot.slane %v32, %v914
  %v916 = vmul.f32 %v910, %v915
  %v917 = vmul.f32 %v911, %v915
  %v918 = vsel %vm174, %v916, 0.0
  %919 = vadd.xlane.f32.xlu0 %v918
  %v920 = vpop.xlane.xlu0 %919
  %v921 = vsel %vm174, %v917, 0.0
  %922 = vadd.xlane.f32.xlu0 %v921
  %v923 = vpop.xlane.xlu0 %922
  %v924 = vlaneseq
  %v925 = vshrl.u32 %v924, 7
  %v926 = vsub.s32 0, %v925
  %v927 = vrot.slane %v33, %v926
  %v928 = vadd.f32 %v920, %v927
  %v929 = vadd.f32 %v923, %v927
  %vm930 = vcmask 64512
  %931 = vst.msk [vmem:[%s3] sm:$0xff] %vm930, %v774
  %932 = vst.msk [vmem:[%s3 + $0x8] sm:$0xff] %vm930, %v775
  %vm933 = vcmask 7168
  %934 = vst.msk [vmem:[%s4] sm:$0xff] %vm933, %v928
  %935 = vst.msk [vmem:[%s4 + $0x8] sm:$0xff] %vm933, %v929
  // Predicated region
  $region14: #{tpu_custom_call.1} parent=0 // pred_check
    _
  $region15: #{tpu_custom_call.1} parent=0 // pred_check_branch
    %937 = sbr.rel (0) target = $region17
  $region16: #{tpu_custom_call.1} parent=0 // pred_region
    _
  $region17: #{tpu_custom_call.1} parent=0 // pred_fallthru
    _
  // Predicated region
  $region18: #{tpu_custom_call.1} parent=0 // pred_check
    _
  $region19: #{tpu_custom_call.1} parent=0 // pred_check_branch
    %939 = sbr.rel (0) target = $region21
  $region20: #{tpu_custom_call.1} parent=0 // pred_region
    _
  $region21: #{tpu_custom_call.1} parent=0 // pred_fallthru
    _
  // Predicated region
  $region22: #{tpu_custom_call.1} parent=0 // pred_check
    _
  $region23: #{tpu_custom_call.1} parent=0 // pred_check_branch
    %941 = sbr.rel (0) target = $region25
  $region24: #{tpu_custom_call.1} parent=0 // pred_region
    _
  $region25: #{tpu_custom_call.1} parent=0 // pred_fallthru
    _
  // Predicated region
  $region26: #{tpu_custom_call.1} parent=0 // pred_check
    _
  $region27: #{tpu_custom_call.1} parent=0 // pred_check_branch
    %943 = sbr.rel (0) target = $region29
  $region28: #{tpu_custom_call.1} parent=0 // pred_region
    _
  $region29: #{tpu_custom_call.1} parent=0 // pred_fallthru
    _

</llo_original>
